<compile_context>
chip_gen: v6e
topology: v6e:2x2x1
jax: 0.10.0
libtpu: 0.0.40
codegen_flags: <defaults>
</compile_context>

<pallas_src>
import jax
import jax.numpy as jnp
from jax import lax
from jax.experimental import pallas as pl
from jax.experimental.pallas import tpu as pltpu


def proto_kernel(data_ref, emb_ref, w_ref, b_ref, out_ref):
    TB = data_ref.shape[0]
    S = data_ref.shape[1] - 2
    V, D = emb_ref.shape
    C = w_ref.shape[1]

    tok = data_ref[:, :S]                                   # (TB, S) int32
    length = data_ref[:, S:S + 1].astype(jnp.float32)       # (TB, 1)  == l.float()
    lab = data_ref[:, S + 1:S + 2]                          # (TB, 1) int32

    # --- bag-of-words counts: statically unrolled over S, vocab on lanes ------
    # Row 1 of the (bf16) table is zero, so padding_idx=1 tokens contribute 0.
    vocab_iota = lax.broadcasted_iota(jnp.int32, (TB, V), 1)
    counts = jnp.zeros((TB, V), jnp.float32)
    for s in range(S):                                      # S small & static here
        counts = counts + (tok[:, s:s + 1] == vocab_iota).astype(jnp.float32)

    # --- embedding sum = counts @ table (MXU, bf16 in / f32 accumulate) -------
    # counts <= S are exact in bf16; emb_ref is already bf16 (no in-kernel cast).
    bag = jnp.dot(counts.astype(jnp.bfloat16), emb_ref[...],
                  preferred_element_type=jnp.float32)       # (TB, D)

    # --- divide by sentence length: torch.div(sum, l) (EUP reciprocal) --------
    avg = bag * pl.reciprocal(length, approx=True)          # (TB, D)

    # --- linear classifier head (stand-in for subclass-defined self.model) ----
    # Kept as an explicit second matmul (not pre-fused table@w) so the head
    # stays a drop-in for whatever `self.model` a subclass defines.
    logits = jnp.dot(avg.astype(jnp.bfloat16), w_ref[...],
                     preferred_element_type=jnp.float32) + b_ref[...]   # (TB, C)

    # --- per-sample cross-entropy (mean finished in the wrapper) --------------
    m = jnp.max(logits, axis=1, keepdims=True)              # (TB, 1)
    lse = m + jnp.log(jnp.sum(jnp.exp(logits - m), axis=1, keepdims=True))
    c_iota = lax.broadcasted_iota(jnp.int32, (TB, C), 1)
    picked = jnp.sum(jnp.where(lab == c_iota, logits, 0.0),
                     axis=1, keepdims=True)                 # (TB, 1)
    loss_vec = lse - picked                                 # (TB, 1)

    # --- per-sample correctness: argmax(logits, 1) == y (first-index ties) ----
    pred = jnp.min(jnp.where(logits == m, c_iota, C), axis=1, keepdims=True)
    correct_vec = (pred == lab).astype(jnp.float32)         # (TB, 1)

    # lane 0 = per-sample loss, lane 1 = per-sample correct flag.
    lane = lax.broadcasted_iota(jnp.int32, (TB, 2), 1)
    out_ref[...] = jnp.where(lane == 0, loss_vec, correct_vec)


def proto_forward(data, sent_maxlen, emb_table, w, b, *, batch_tile=8):
    """data: (B, sent_maxlen + 2) int -> (loss scalar, accuracy scalar)."""
    B = data.shape[0]
    assert data.shape[1] == sent_maxlen + 2
    TB = batch_tile if (B % batch_tile == 0) else B
    num_tiles = B // TB
    V, D = emb_table.shape
    C = w.shape[1]

    # VMEM budget: resident table/head + double-buffered data/out tiles +
    # (TB, V) f32 counts & temporaries, x4 headroom, floor 8 MiB, cap 48 MiB
    # (v7x has only 64 MiB physical VMEM).
    resident = (emb_table.size * emb_table.dtype.itemsize
                + w.size * w.dtype.itemsize + b.size * b.dtype.itemsize)
    per_tile = 2 * (TB * (sent_maxlen + 2) * 4 + TB * 2 * 4)
    scratch = 4 * TB * V * 4
    vmem_limit = int(min(48 * 1024 * 1024,
                         max(8 * 1024 * 1024, 4 * (resident + per_tile + scratch))))

    out = pl.pallas_call(
        proto_kernel,
        out_shape=jax.ShapeDtypeStruct((B, 2), jnp.float32),
        grid=(num_tiles,),
        in_specs=[
            pl.BlockSpec((TB, sent_maxlen + 2), lambda i: (i, 0)),  # data tile
            pl.BlockSpec((V, D), lambda i: (0, 0)),                 # bf16 table (resident)
            pl.BlockSpec((D, C), lambda i: (0, 0)),                 # bf16 head weight
            pl.BlockSpec((1, C), lambda i: (0, 0)),                 # f32 head bias
        ],
        out_specs=pl.BlockSpec((TB, 2), lambda i: (i, 0)),
        compiler_params=pltpu.CompilerParams(
            dimension_semantics=("parallel",),       # shard batch tiles over v7x TCs
            vmem_limit_bytes=vmem_limit),
    )(data.astype(jnp.int32), emb_table, w, b)

    loss = jnp.mean(out[:, 0])        # CrossEntropyLoss(reduction='mean')
    acc = jnp.mean(out[:, 1])         # mean(argmax == y)
    return loss, acc


if __name__ == "__main__":
    # Small shapes implied by the forward pass.
    num_emb, input_dim, num_classes = 32, 16, 4    # V, D, C
    batch, sent_maxlen = 16, 8                     # B, S

    key = jax.random.PRNGKey(0)
    k_pre, k_head3, k_w, k_b, k_tok, k_len, k_lab = jax.random.split(key, 7)

    # nn.Embedding weight: rows [3:] copied from pretrained_weight, row 1 is the
    # padding row (zeros), rows 0/2 keep their random init.
    pretrained_weight = jax.random.normal(k_pre, (num_emb - 3, input_dim),
                                          dtype=jnp.float32)
    head_rows = jax.random.normal(k_head3, (3, input_dim), dtype=jnp.float32)
    emb_table = jnp.concatenate([head_rows, pretrained_weight], axis=0)
    emb_table = emb_table.at[1].set(0.0)           # padding_idx = 1
    emb_table = emb_table.astype(jnp.bfloat16)     # stored persistently in bf16

    # Linear head parameters (deterministic).  Weight stored in bf16, bias f32.
    w = (0.1 * jax.random.normal(k_w, (input_dim, num_classes),
                                 dtype=jnp.float32)).astype(jnp.bfloat16)
    b = 0.01 * jax.random.normal(k_b, (1, num_classes), dtype=jnp.float32)

    # Build `data` = [token ids | length | label], one int tensor like in PyTorch.
    tokens = jax.random.randint(k_tok, (batch, sent_maxlen), 0, num_emb,
                                dtype=jnp.int32)
    lengths = jax.random.randint(k_len, (batch, 1), 3, sent_maxlen + 1,
                                 dtype=jnp.int32)
    labels = jax.random.randint(k_lab, (batch, 1), 0, num_classes,
                                dtype=jnp.int32)
    data = jnp.concatenate([tokens, lengths, labels], axis=1)   # (B, S+2)

    loss, acc = proto_forward(data, sent_maxlen, emb_table, w, b)
    jax.block_until_ready((loss, acc))
    print("KERNEL_OK")
</pallas_src>

<mosaic_0001>
module attributes {stable_mosaic.version = 11 : i64} {
  func.func @proto_kernel(%arg0: i32, %arg1: memref<8x10xi32, #tpu.memory_space<vmem>>, %arg2: memref<32x16xbf16, #tpu.memory_space<vmem>>, %arg3: memref<16x4xbf16, #tpu.memory_space<vmem>>, %arg4: memref<1x4xf32, #tpu.memory_space<vmem>>, %arg5: memref<8x2xf32, #tpu.memory_space<vmem>>) attributes {dimension_semantics = [#tpu.dimension_semantics<parallel>], iteration_bounds = array<i64: 2>, scalar_prefetch = 0 : i64, scratch_operands = 0 : i64, tpu.core_type = #tpu.core_type<tc>, window_params = [{transform_indices = @transform_0, window_bounds = array<i64: 8, 10>}, {pipeline_mode = #tpu.pipeline_mode<synchronous>, transform_indices = @transform_1, window_bounds = array<i64: 32, 16>}, {pipeline_mode = #tpu.pipeline_mode<synchronous>, transform_indices = @transform_2, window_bounds = array<i64: 16, 4>}, {pipeline_mode = #tpu.pipeline_mode<synchronous>, transform_indices = @transform_3, window_bounds = array<i64: 1, 4>}, {transform_indices = @transform_4, window_bounds = array<i64: 8, 2>}]} {
    %c0 = arith.constant 0 : index
    %c0_0 = arith.constant 0 : index
    %0 = vector.load %arg1[%c0, %c0_0] : memref<8x10xi32, #tpu.memory_space<vmem>>, vector<8x8xi32>
    %c0_1 = arith.constant 0 : index
    %c8 = arith.constant 8 : index
    %1 = vector.load %arg1[%c0_1, %c8] : memref<8x10xi32, #tpu.memory_space<vmem>>, vector<8x1xi32>
    %2 = arith.sitofp %1 : vector<8x1xi32> to vector<8x1xf32>
    %c0_2 = arith.constant 0 : index
    %c9 = arith.constant 9 : index
    %3 = vector.load %arg1[%c0_2, %c9] : memref<8x10xi32, #tpu.memory_space<vmem>>, vector<8x1xi32>
    %4 = tpu.iota {dimensions = array<i32: 1>} : vector<8x32xi32>
    %cst = arith.constant 0.000000e+00 : f32
    %5 = vector.broadcast %cst : f32 to vector<8x32xf32>
    %6 = vector.extract_strided_slice %0 {offsets = [0, 0], sizes = [8, 1], strides = [1, 1]} : vector<8x8xi32> to vector<8x1xi32>
    %7 = vector.broadcast %6 : vector<8x1xi32> to vector<8x32xi32>
    %8 = arith.cmpi eq, %7, %4 : vector<8x32xi32>
    %9 = arith.extui %8 : vector<8x32xi1> to vector<8x32xi32>
    %10 = arith.sitofp %9 : vector<8x32xi32> to vector<8x32xf32>
    %11 = arith.addf %5, %10 : vector<8x32xf32>
    %12 = vector.extract_strided_slice %0 {offsets = [0, 1], sizes = [8, 1], strides = [1, 1]} : vector<8x8xi32> to vector<8x1xi32>
    %13 = vector.broadcast %12 : vector<8x1xi32> to vector<8x32xi32>
    %14 = arith.cmpi eq, %13, %4 : vector<8x32xi32>
    %15 = arith.extui %14 : vector<8x32xi1> to vector<8x32xi32>
    %16 = arith.sitofp %15 : vector<8x32xi32> to vector<8x32xf32>
    %17 = arith.addf %11, %16 : vector<8x32xf32>
    %18 = vector.extract_strided_slice %0 {offsets = [0, 2], sizes = [8, 1], strides = [1, 1]} : vector<8x8xi32> to vector<8x1xi32>
    %19 = vector.broadcast %18 : vector<8x1xi32> to vector<8x32xi32>
    %20 = arith.cmpi eq, %19, %4 : vector<8x32xi32>
    %21 = arith.extui %20 : vector<8x32xi1> to vector<8x32xi32>
    %22 = arith.sitofp %21 : vector<8x32xi32> to vector<8x32xf32>
    %23 = arith.addf %17, %22 : vector<8x32xf32>
    %24 = vector.extract_strided_slice %0 {offsets = [0, 3], sizes = [8, 1], strides = [1, 1]} : vector<8x8xi32> to vector<8x1xi32>
    %25 = vector.broadcast %24 : vector<8x1xi32> to vector<8x32xi32>
    %26 = arith.cmpi eq, %25, %4 : vector<8x32xi32>
    %27 = arith.extui %26 : vector<8x32xi1> to vector<8x32xi32>
    %28 = arith.sitofp %27 : vector<8x32xi32> to vector<8x32xf32>
    %29 = arith.addf %23, %28 : vector<8x32xf32>
    %30 = vector.extract_strided_slice %0 {offsets = [0, 4], sizes = [8, 1], strides = [1, 1]} : vector<8x8xi32> to vector<8x1xi32>
    %31 = vector.broadcast %30 : vector<8x1xi32> to vector<8x32xi32>
    %32 = arith.cmpi eq, %31, %4 : vector<8x32xi32>
    %33 = arith.extui %32 : vector<8x32xi1> to vector<8x32xi32>
    %34 = arith.sitofp %33 : vector<8x32xi32> to vector<8x32xf32>
    %35 = arith.addf %29, %34 : vector<8x32xf32>
    %36 = vector.extract_strided_slice %0 {offsets = [0, 5], sizes = [8, 1], strides = [1, 1]} : vector<8x8xi32> to vector<8x1xi32>
    %37 = vector.broadcast %36 : vector<8x1xi32> to vector<8x32xi32>
    %38 = arith.cmpi eq, %37, %4 : vector<8x32xi32>
    %39 = arith.extui %38 : vector<8x32xi1> to vector<8x32xi32>
    %40 = arith.sitofp %39 : vector<8x32xi32> to vector<8x32xf32>
    %41 = arith.addf %35, %40 : vector<8x32xf32>
    %42 = vector.extract_strided_slice %0 {offsets = [0, 6], sizes = [8, 1], strides = [1, 1]} : vector<8x8xi32> to vector<8x1xi32>
    %43 = vector.broadcast %42 : vector<8x1xi32> to vector<8x32xi32>
    %44 = arith.cmpi eq, %43, %4 : vector<8x32xi32>
    %45 = arith.extui %44 : vector<8x32xi1> to vector<8x32xi32>
    %46 = arith.sitofp %45 : vector<8x32xi32> to vector<8x32xf32>
    %47 = arith.addf %41, %46 : vector<8x32xf32>
    %48 = vector.extract_strided_slice %0 {offsets = [0, 7], sizes = [8, 1], strides = [1, 1]} : vector<8x8xi32> to vector<8x1xi32>
    %49 = vector.broadcast %48 : vector<8x1xi32> to vector<8x32xi32>
    %50 = arith.cmpi eq, %49, %4 : vector<8x32xi32>
    %51 = arith.extui %50 : vector<8x32xi1> to vector<8x32xi32>
    %52 = arith.sitofp %51 : vector<8x32xi32> to vector<8x32xf32>
    %53 = arith.addf %47, %52 : vector<8x32xf32>
    %54 = arith.truncf %53 : vector<8x32xf32> to vector<8x32xbf16>
    %c0_3 = arith.constant 0 : index
    %c0_4 = arith.constant 0 : index
    %55 = vector.load %arg2[%c0_3, %c0_4] : memref<32x16xbf16, #tpu.memory_space<vmem>>, vector<32x16xbf16>
    %cst_5 = arith.constant dense<0.000000e+00> : vector<8x16xf32>
    %56 = tpu.matmul %54, %55, %cst_5 {dimension_numbers = #tpu.dot_dimension_numbers<[1], [0], [0], [1], [0, 0, 1, 1], [], []>} : vector<8x32xbf16>, vector<32x16xbf16>, vector<8x16xf32> -> vector<8x16xf32>
    %57 = tpu.reciprocal %2 {approx = true} : vector<8x1xf32> -> vector<8x1xf32>
    %58 = vector.broadcast %57 : vector<8x1xf32> to vector<8x16xf32>
    %59 = arith.mulf %56, %58 : vector<8x16xf32>
    %60 = arith.truncf %59 : vector<8x16xf32> to vector<8x16xbf16>
    %c0_6 = arith.constant 0 : index
    %c0_7 = arith.constant 0 : index
    %61 = vector.load %arg3[%c0_6, %c0_7] : memref<16x4xbf16, #tpu.memory_space<vmem>>, vector<16x4xbf16>
    %cst_8 = arith.constant dense<0.000000e+00> : vector<8x4xf32>
    %62 = tpu.matmul %60, %61, %cst_8 {dimension_numbers = #tpu.dot_dimension_numbers<[1], [0], [0], [1], [0, 0, 1, 1], [], []>} : vector<8x16xbf16>, vector<16x4xbf16>, vector<8x4xf32> -> vector<8x4xf32>
    %c0_9 = arith.constant 0 : index
    %c0_10 = arith.constant 0 : index
    %63 = vector.load %arg4[%c0_9, %c0_10] : memref<1x4xf32, #tpu.memory_space<vmem>>, vector<1x4xf32>
    %64 = vector.broadcast %63 : vector<1x4xf32> to vector<8x4xf32>
    %65 = arith.addf %62, %64 : vector<8x4xf32>
    %cst_11 = arith.constant dense<0xFF800000> : vector<8xf32>
    %66 = vector.multi_reduction <maximumf>, %65, %cst_11 [1] : vector<8x4xf32> to vector<8xf32>
    %67 = vector.shape_cast %66 : vector<8xf32> to vector<8x1xf32>
    %68 = vector.broadcast %67 : vector<8x1xf32> to vector<8x4xf32>
    %69 = arith.subf %65, %68 : vector<8x4xf32>
    %70 = math.exp %69 : vector<8x4xf32>
    %cst_12 = arith.constant dense<0.000000e+00> : vector<8xf32>
    %71 = vector.multi_reduction <add>, %70, %cst_12 [1] : vector<8x4xf32> to vector<8xf32>
    %72 = vector.shape_cast %71 : vector<8xf32> to vector<8x1xf32>
    %73 = math.log %72 : vector<8x1xf32>
    %74 = arith.addf %67, %73 : vector<8x1xf32>
    %75 = tpu.iota {dimensions = array<i32: 1>} : vector<8x4xi32>
    %76 = vector.broadcast %3 : vector<8x1xi32> to vector<8x4xi32>
    %77 = arith.cmpi eq, %76, %75 : vector<8x4xi32>
    %cst_13 = arith.constant 0.000000e+00 : f32
    %78 = vector.broadcast %cst_13 : f32 to vector<8x4xf32>
    %79 = arith.select %77, %65, %78 : vector<8x4xi1>, vector<8x4xf32>
    %cst_14 = arith.constant dense<0.000000e+00> : vector<8xf32>
    %80 = vector.multi_reduction <add>, %79, %cst_14 [1] : vector<8x4xf32> to vector<8xf32>
    %81 = vector.shape_cast %80 : vector<8xf32> to vector<8x1xf32>
    %82 = arith.subf %74, %81 : vector<8x1xf32>
    %83 = vector.broadcast %67 : vector<8x1xf32> to vector<8x4xf32>
    %84 = arith.cmpf oeq, %65, %83 : vector<8x4xf32>
    %c4_i32 = arith.constant 4 : i32
    %85 = vector.broadcast %c4_i32 : i32 to vector<8x4xi32>
    %86 = arith.select %84, %75, %85 : vector<8x4xi1>, vector<8x4xi32>
    %cst_15 = arith.constant dense<2147483647> : vector<8xi32>
    %87 = vector.multi_reduction <minsi>, %86, %cst_15 [1] : vector<8x4xi32> to vector<8xi32>
    %88 = vector.shape_cast %87 : vector<8xi32> to vector<8x1xi32>
    %89 = arith.cmpi eq, %88, %3 : vector<8x1xi32>
    %90 = arith.extui %89 : vector<8x1xi1> to vector<8x1xi32>
    %91 = arith.sitofp %90 : vector<8x1xi32> to vector<8x1xf32>
    %92 = tpu.iota {dimensions = array<i32: 1>} : vector<8x2xi32>
    %c0_i32 = arith.constant 0 : i32
    %93 = vector.broadcast %c0_i32 : i32 to vector<8x2xi32>
    %94 = arith.cmpi eq, %92, %93 : vector<8x2xi32>
    %95 = vector.shape_cast %82 : vector<8x1xf32> to vector<8x1xf32>
    %96 = vector.broadcast %95 : vector<8x1xf32> to vector<8x2xf32>
    %97 = vector.shape_cast %91 : vector<8x1xf32> to vector<8x1xf32>
    %98 = vector.broadcast %97 : vector<8x1xf32> to vector<8x2xf32>
    %99 = arith.select %94, %96, %98 : vector<8x2xi1>, vector<8x2xf32>
    %c0_16 = arith.constant 0 : index
    %c0_17 = arith.constant 0 : index
    %100 = vector.load %arg5[%c0_16, %c0_17] : memref<8x2xf32, #tpu.memory_space<vmem>>, vector<8x2xf32>
    tpu.vector_store %arg5[%c0_16, %c0_17], %99 {strides = array<i32>} : memref<8x2xf32, #tpu.memory_space<vmem>>, vector<8x2xf32>,
    return
  }
  func.func @transform_0(%arg0: i32) -> (i32, i32) {
    %c0_i32 = arith.constant 0 : i32
    %c0_i32_0 = arith.constant 0 : i32
    return %arg0, %c0_i32 : i32, i32
  }
  func.func @transform_1(%arg0: i32) -> (i32, i32) {
    %c0_i32 = arith.constant 0 : i32
    %c0_i32_0 = arith.constant 0 : i32
    %c0_i32_1 = arith.constant 0 : i32
    return %c0_i32, %c0_i32_0 : i32, i32
  }
  func.func @transform_2(%arg0: i32) -> (i32, i32) {
    %c0_i32 = arith.constant 0 : i32
    %c0_i32_0 = arith.constant 0 : i32
    %c0_i32_1 = arith.constant 0 : i32
    return %c0_i32, %c0_i32_0 : i32, i32
  }
  func.func @transform_3(%arg0: i32) -> (i32, i32) {
    %c0_i32 = arith.constant 0 : i32
    %c0_i32_0 = arith.constant 0 : i32
    %c0_i32_1 = arith.constant 0 : i32
    return %c0_i32, %c0_i32_0 : i32, i32
  }
  func.func @transform_4(%arg0: i32) -> (i32, i32) {
    %c0_i32 = arith.constant 0 : i32
    %c0_i32_0 = arith.constant 0 : i32
    return %arg0, %c0_i32 : i32, i32
  }
}

</mosaic_0001>

<llo_original>
// kernel: tpu_custom_call.1
$region0: #{tpu_custom_call.1}
  #allocation0 [shape = 'u32[]', space=smem, size = 0x4, offset = 0x4, fixed_abs, tag = 'smem constant byte address 0x4 - core index']
  #allocation1 [shape = 'u32[144,128]{1,0:T(1,128)}', space=vmem, size = 0x12000, scoped, tag = 'internal scratch']
  %s0 = inlined_call_operand.vmem [shape: s32[16,10], index: 0, kind: input, shape index: {}]
  %s1 = inlined_call_operand.vmem [shape: bf16[32,16], index: 1, kind: input, shape index: {}]
  %s2 = inlined_call_operand.vmem [shape: bf16[16,4], index: 2, kind: input, shape index: {}]
  %s3 = inlined_call_operand.vmem [shape: f32[1,4], index: 3, kind: input, shape index: {}]
  %s4 = inlined_call_operand.vmem [shape: f32[16,2], index: 4, kind: output, shape index: {}]
  %s5 = sld [smem:[#allocation0]]
  $region49: #{tpu_custom_call.1} parent=0
    _
  %s7 = ssub.s32 1, %s5
  %s8 = scalar_select 0, %s7, %s5
  loop: start=0, step=1, limit=4
  $region2: #{tpu_custom_call.1} parent=0 // loop_pre_header
    _
  $region3: #{tpu_custom_call.1} parent=0 // loop_header
    %s10 = sphi 0, %s14
    %p11 = scmp.ge.s32.totalorder %s10, 4
    %s20 = sphi 0, %s22
    %s23 = sphi 0, %s20
    %s24 = sphi 0, %s23
    %s40 = sphi 0, %s24
    %s44 = sphi 0, %s44
    %s46 = sphi 0, %s44
    %s47 = sphi 0, %s46
    %s61 = sphi 0, %s47
    %s65 = sphi 0, %s65
    %s67 = sphi 0, %s65
    %s68 = sphi 0, %s67
    %s82 = sphi 0, %s68
    %s86 = sphi 0, %s86
    %s88 = sphi 0, %s86
    %s89 = sphi 0, %s88
    %s103 = sphi 0, %s89
    %s109 = sphi 0, %s111
    %s112 = sphi 0, %s109
    %s113 = sphi 0, %s112
    %s129 = sphi 0, %s113
  $region4: #{tpu_custom_call.1} parent=0 // loop_header_branch
    %13 = sbr.rel (%p11) target = $region8
  $region5: #{tpu_custom_call.1} parent=0 // loop_body
    %s15 = ssub.s32 %s10, 1
    %s16 = ssub.s32 %s10, 2
    %s17 = sadd.s32 %s10, 1
    %s18 = ssub.s32 %s10, %s17
    %p19 = scmp.eq.s32.totalorder %s18, 0
    %s21 = sadd.s32 %s20, 1
    %s22 = scalar_select %p19, %s20, %s21
    %p25 = pneg %p19
    %p26 = scmp.eq.s32.totalorder %s10, 1
    %p27 = por %p25, %p26
    %p28 = scmp.ne.s32.totalorder %s20, %s23
    %p29 = scmp.eq.s32.totalorder %s10, 0
    %p30 = por %p28, %p29
    %p31 = scmp.ne.s32.totalorder %s20, %s23
    %p32 = scmp.eq.s32.totalorder %s15, 1
    %p33 = por %p31, %p32
    %p34 = scmp.ne.s32.totalorder %s23, %s24
    %p35 = scmp.eq.s32.totalorder %s15, 0
    %p36 = por %p34, %p35
    %p37 = scmp.ne.s32.totalorder %s23, %s24
    %p38 = scmp.eq.s32.totalorder %s16, 1
    %p39 = por %p37, %p38
    %p41 = scmp.ne.s32.totalorder %s24, %s40
    %p42 = scmp.eq.s32.totalorder %s16, 0
    %p43 = por %p41, %p42
    %s45 = sadd.s32 %s44, 1
    %p48 = scmp.eq.s32.totalorder %s10, 1
    %p49 = scmp.ne.s32.totalorder %s44, %s46
    %p50 = scmp.eq.s32.totalorder %s10, 0
    %p51 = por %p49, %p50
    %p52 = scmp.ne.s32.totalorder %s44, %s46
    %p53 = scmp.eq.s32.totalorder %s15, 1
    %p54 = por %p52, %p53
    %p55 = scmp.ne.s32.totalorder %s46, %s47
    %p56 = scmp.eq.s32.totalorder %s15, 0
    %p57 = por %p55, %p56
    %p58 = scmp.ne.s32.totalorder %s46, %s47
    %p59 = scmp.eq.s32.totalorder %s16, 1
    %p60 = por %p58, %p59
    %p62 = scmp.ne.s32.totalorder %s47, %s61
    %p63 = scmp.eq.s32.totalorder %s16, 0
    %p64 = por %p62, %p63
    %s66 = sadd.s32 %s65, 1
    %p69 = scmp.eq.s32.totalorder %s10, 1
    %p70 = scmp.ne.s32.totalorder %s65, %s67
    %p71 = scmp.eq.s32.totalorder %s10, 0
    %p72 = por %p70, %p71
    %p73 = scmp.ne.s32.totalorder %s65, %s67
    %p74 = scmp.eq.s32.totalorder %s15, 1
    %p75 = por %p73, %p74
    %p76 = scmp.ne.s32.totalorder %s67, %s68
    %p77 = scmp.eq.s32.totalorder %s15, 0
    %p78 = por %p76, %p77
    %p79 = scmp.ne.s32.totalorder %s67, %s68
    %p80 = scmp.eq.s32.totalorder %s16, 1
    %p81 = por %p79, %p80
    %p83 = scmp.ne.s32.totalorder %s68, %s82
    %p84 = scmp.eq.s32.totalorder %s16, 0
    %p85 = por %p83, %p84
    %s87 = sadd.s32 %s86, 1
    %p90 = scmp.eq.s32.totalorder %s10, 1
    %p91 = scmp.ne.s32.totalorder %s86, %s88
    %p92 = scmp.eq.s32.totalorder %s10, 0
    %p93 = por %p91, %p92
    %p94 = scmp.ne.s32.totalorder %s86, %s88
    %p95 = scmp.eq.s32.totalorder %s15, 1
    %p96 = por %p94, %p95
    %p97 = scmp.ne.s32.totalorder %s88, %s89
    %p98 = scmp.eq.s32.totalorder %s15, 0
    %p99 = por %p97, %p98
    %p100 = scmp.ne.s32.totalorder %s88, %s89
    %p101 = scmp.eq.s32.totalorder %s16, 1
    %p102 = por %p100, %p101
    %p104 = scmp.ne.s32.totalorder %s89, %s103
    %p105 = scmp.eq.s32.totalorder %s16, 0
    %p106 = por %p104, %p105
    %s107 = ssub.s32 %s10, %s17
    %p108 = scmp.eq.s32.totalorder %s107, 0
    %s110 = sadd.s32 %s109, 1
    %s111 = scalar_select %p108, %s109, %s110
    %p114 = pneg %p108
    %p115 = scmp.eq.s32.totalorder %s10, 1
    %p116 = por %p114, %p115
    %p117 = scmp.ne.s32.totalorder %s109, %s112
    %p118 = scmp.eq.s32.totalorder %s10, 0
    %p119 = por %p117, %p118
    %p120 = scmp.ne.s32.totalorder %s109, %s112
    %p121 = scmp.eq.s32.totalorder %s15, 1
    %p122 = por %p120, %p121
    %p123 = scmp.ne.s32.totalorder %s112, %s113
    %p124 = scmp.eq.s32.totalorder %s15, 0
    %p125 = por %p123, %p124
    %p126 = scmp.ne.s32.totalorder %s112, %s113
    %p127 = scmp.eq.s32.totalorder %s16, 1
    %p128 = por %p126, %p127
    %p130 = scmp.ne.s32.totalorder %s113, %s129
    %p131 = scmp.eq.s32.totalorder %s16, 0
    %p132 = por %p130, %p131
    %p133 = scmp.le.s32.totalorder 1, %s10
    %p134 = scmp.lt.s32.totalorder %s10, 3
    %p135 = pnand %p133, %p134
    %p136 = pneg %p135
    // Predicated region
    $region9: #{tpu_custom_call.1} parent=5 // pred_check
      _
    $region10: #{tpu_custom_call.1} parent=5 // pred_check_branch
      %138 = sbr.rel (%p135) target = $region12
    $region11: #{tpu_custom_call.1} parent=5 // pred_region
      %s139 = ssub.s32 %s10, 1
      // Predicated region
      $region13: #{tpu_custom_call.1} parent=11 // pred_check
        %p140 = pneg %p57
      $region14: #{tpu_custom_call.1} parent=11 // pred_check_branch
        %142 = sbr.rel (%p140) target = $region16
      $region15: #{tpu_custom_call.1} parent=11 // pred_region
        _
      $region16: #{tpu_custom_call.1} parent=11 // pred_fallthru
        _
      // Predicated region
      $region17: #{tpu_custom_call.1} parent=11 // pred_check
        %p143 = pneg %p78
      $region18: #{tpu_custom_call.1} parent=11 // pred_check_branch
        %145 = sbr.rel (%p143) target = $region20
      $region19: #{tpu_custom_call.1} parent=11 // pred_region
        _
      $region20: #{tpu_custom_call.1} parent=11 // pred_fallthru
        _
      // Predicated region
      $region21: #{tpu_custom_call.1} parent=11 // pred_check
        %p146 = pneg %p99
      $region22: #{tpu_custom_call.1} parent=11 // pred_check_branch
        %148 = sbr.rel (%p146) target = $region24
      $region23: #{tpu_custom_call.1} parent=11 // pred_region
        _
      $region24: #{tpu_custom_call.1} parent=11 // pred_fallthru
        _
    $region12: #{tpu_custom_call.1} parent=5 // pred_fallthru
      _
    %p149 = scmp.lt.s32.totalorder %s10, 2
    // Predicated region
    $region25: #{tpu_custom_call.1} parent=5 // pred_check
      %p150 = pneg %p149
    $region26: #{tpu_custom_call.1} parent=5 // pred_check_branch
      %152 = sbr.rel (%p150) target = $region28
    $region27: #{tpu_custom_call.1} parent=5 // pred_region
      // Predicated region
      $region29: #{tpu_custom_call.1} parent=27 // pred_check
        %p153 = pneg %p30
      $region30: #{tpu_custom_call.1} parent=27 // pred_check_branch
        %155 = sbr.rel (%p153) target = $region32
      $region31: #{tpu_custom_call.1} parent=27 // pred_region
        %p156 = scmp.lt.s32.totalorder %s10, 1
        %s157 = scalar_select %p156, %s10, 1
        %s158 = smul.addr %s157, 8
        %s159 = scalar_lea.vmem %s0, %s158
      $region32: #{tpu_custom_call.1} parent=27 // pred_fallthru
        _
    $region28: #{tpu_custom_call.1} parent=5 // pred_fallthru
      _
    %p160 = scmp.le.s32.totalorder 1, %s10
    %p161 = scmp.lt.s32.totalorder %s10, 3
    %p162 = pnand %p160, %p161
    %p163 = pneg %p162
    // Predicated region
    $region33: #{tpu_custom_call.1} parent=5 // pred_check
      _
    $region34: #{tpu_custom_call.1} parent=5 // pred_check_branch
      %165 = sbr.rel (%p162) target = $region36
    $region35: #{tpu_custom_call.1} parent=5 // pred_region
      %s166 = ssub.s32 %s10, 1
      %p167 = scmp.lt.s32.totalorder %s15, 1
      %s168 = scalar_select %p167, %s15, 1
      %s169 = smul.addr %s168, 8
      %s170 = scalar_lea.vmem %s0, %s169
      %p171 = pneg %p36
      %p172 = pneg %p33
      %p173 = pneg %p57
      %p174 = pneg %p54
      %p175 = pneg %p78
      %p176 = pneg %p75
      %p177 = pneg %p99
      %p178 = pneg %p96
      %p179 = pneg %p125
      %p180 = pneg %p122
      %p181 = scmp.lt.s32.totalorder %s15, 1
      %s182 = scalar_select %p181, %s15, 1
      %s183 = smul.addr %s182, 8
      %s184 = scalar_lea.vmem %s4, %s183
      %p185 = scmp.lt.s32.totalorder %s15, 1
      %s186 = scalar_select %p185, %s15, 1
      %s187 = smul.addr %s186, 8
      %s188 = scalar_lea.vmem %s0, %s187
      %p189 = scmp.lt.s32.totalorder %s15, 1
      %s190 = scalar_select %p189, %s15, 1
      %s191 = smul.addr %s190, 8
      %s192 = scalar_lea.vmem %s4, %s191
      %v194 = vld [vmem:[%s188] sm:$0xff]
      %v195 = vcvt.s32.f32 %v194
      %v196 = vlaneseq
      %v197 = vand.u32 %v196, 127
      %198 = vset.pattern.permute.xlu0 0
      %199 = vperm.xlu0 %198, %v194
      %v200 = vpop.permute.xlu0 %199
      %vm201 = vcmp.eq.s32.totalorder %v200, %v197
      %v202 = vsel %vm201, 1, 0
      %v203 = vcvt.s32.f32 %v202
      %v204 = vadd.f32 %v203, 0.0
      %205 = vset.pattern.permute.xlu0 1
      %206 = vperm.xlu0 %205, %v194
      %v207 = vpop.permute.xlu0 %206
      %vm208 = vcmp.eq.s32.totalorder %v207, %v197
      %v209 = vsel %vm208, 1, 0
      %v210 = vcvt.s32.f32 %v209
      %v211 = vadd.f32 %v204, %v210
      %212 = vset.pattern.permute.xlu0 2
      %213 = vperm.xlu0 %212, %v194
      %v214 = vpop.permute.xlu0 %213
      %vm215 = vcmp.eq.s32.totalorder %v214, %v197
      %v216 = vsel %vm215, 1, 0
      %v217 = vcvt.s32.f32 %v216
      %v218 = vadd.f32 %v211, %v217
      %219 = vset.pattern.permute.xlu0 3
      %220 = vperm.xlu0 %219, %v194
      %v221 = vpop.permute.xlu0 %220
      %vm222 = vcmp.eq.s32.totalorder %v221, %v197
      %v223 = vsel %vm222, 1, 0
      %v224 = vcvt.s32.f32 %v223
      %v225 = vadd.f32 %v218, %v224
      %226 = vset.pattern.permute.xlu0 4
      %227 = vperm.xlu0 %226, %v194
      %v228 = vpop.permute.xlu0 %227
      %vm229 = vcmp.eq.s32.totalorder %v228, %v197
      %v230 = vsel %vm229, 1, 0
      %v231 = vcvt.s32.f32 %v230
      %v232 = vadd.f32 %v225, %v231
      %233 = vset.pattern.permute.xlu0 5
      %234 = vperm.xlu0 %233, %v194
      %v235 = vpop.permute.xlu0 %234
      %vm236 = vcmp.eq.s32.totalorder %v235, %v197
      %v237 = vsel %vm236, 1, 0
      %v238 = vcvt.s32.f32 %v237
      %v239 = vadd.f32 %v232, %v238
      %240 = vset.pattern.permute.xlu0 6
      %241 = vperm.xlu0 %240, %v194
      %v242 = vpop.permute.xlu0 %241
      %vm243 = vcmp.eq.s32.totalorder %v242, %v197
      %v244 = vsel %vm243, 1, 0
      %v245 = vcvt.s32.f32 %v244
      %v246 = vadd.f32 %v239, %v245
      %247 = vset.pattern.permute.xlu0 7
      %248 = vperm.xlu0 %247, %v194
      %v249 = vpop.permute.xlu0 %248
      %vm250 = vcmp.eq.s32.totalorder %v249, %v197
      %v251 = vsel %vm250, 1, 0
      %v252 = vcvt.s32.f32 %v251
      %v253 = vadd.f32 %v246, %v252
      %v254 = vpack.c.bf16 %v253, %v253
      %v255 = vld [vmem:[%s1] sm:$0xf]
      %v256 = vld [vmem:[%s1 + $0x4] sm:$0xf]
      %v257 = vld [vmem:[%s1 + $0x8] sm:$0xf]
      %v258 = vld [vmem:[%s1 + $0xc] sm:$0xf]
      %v263 = vunpack.c.l.b16 %v255
      %v264 = vunpack.c.l.b16 %v256
      %v265 = vunpack.c.l.b16 %v257
      %v266 = vunpack.c.l.b16 %v258
      %v267 = vpack.c.b16 %v264, %v263
      %v268 = vpack.c.b16 %v266, %v265
      %vm271 = vcmask 261120
      %v273 = vsel %vm271, %v254, 0
      %275 = vmatprep.subr.bf16.mxu0 0
      %276 = vmatpush1.bf16.msra.mxu0 0
      %277 = vmatprep.subr.bf16.mxu0 0
      %278 = vmatpush1.bf16.msra.mxu0 0
      %279 = vmatprep.subr.bf16.mxu0 0
      %280 = vmatpush1.bf16.msra.mxu0 0
      %281 = vmatprep.subr.bf16.mxu0 0
      %282 = vmatpush1.bf16.msra.mxu0 0
      %283 = vmatprep.subr.bf16.mxu0 0
      %284 = vmatpush1.bf16.msra.mxu0 0
      %285 = vmatprep.subr.bf16.mxu0 0
      %286 = vmatpush1.bf16.msra.mxu0 0
      %287 = vmatprep.subr.bf16.mxu0 0
      %288 = vmatpush1.bf16.msra.mxu0 %v268
      %289 = vmatprep.subr.bf16.mxu0 0
      %290 = vmatpush1.bf16.msra.mxu0 %v267
      %291 = vmatprep.subr.bf16.mxu0 0
      %292 = vmatpush2.bf16.msra.mxu0 0
      %293 = vmatprep.subr.bf16.mxu0 0
      %294 = vmatpush2.bf16.msra.mxu0 0
      %295 = vmatprep.subr.bf16.mxu0 0
      %296 = vmatpush2.bf16.msra.mxu0 0
      %297 = vmatprep.subr.bf16.mxu0 0
      %298 = vmatpush2.bf16.msra.mxu0 0
      %299 = vmatprep.subr.bf16.mxu0 0
      %300 = vmatpush2.bf16.msra.mxu0 0
      %301 = vmatprep.subr.bf16.mxu0 0
      %302 = vmatpush2.bf16.msra.mxu0 0
      %303 = vmatprep.subr.bf16.mxu0 0
      %304 = vmatpush2.bf16.msra.mxu0 0
      %305 = vmatprep.subr.bf16.mxu0 0
      %306 = vmatpush2.bf16.msra.mxu0 0
      %307 = vmatprep.mubr.bf16.mxu0 0
      %308 = vmatmul.mubr.bf16.gmra.mxu0 %v273
      %v309 = vpop.f32.mrf.mxu0
      %v310 = vadd.f32 0.0, %v309
      %v311 = vpop.f32.mrf.mxu0
      %v312 = vpop.f32.mrf.mxu0
      %v313 = vpop.f32.mrf.mxu0
      %314 = vdwg.mxu0
      %v315 = vrcp.pop %v195
      %317 = vset.pattern.permute.xlu0 8
      %318 = vperm.xlu0 %317, %v315
      %v319 = vpop.permute.xlu0 %318
      %v321 = vmul.f32 %v310, %v319
      %v322 = vpack.c.bf16 %v321, %v321
      %v323 = vld [vmem:[%s2] sm:$0xf]
      %v324 = vld [vmem:[%s2 + $0x4] sm:$0xf]
      %v325 = vld [vmem:[%s3] sm:$0x1]
      %v327 = vlaneseq
      %v328 = vshrl.u32 %v327, 7
      %v329 = vsub.s32 0, %v328
      %v330 = vrot.slane %v325, %v329
      %v334 = vunpack.c.l.b16 %v323
      %v335 = vunpack.c.l.b16 %v324
      %v336 = vpack.c.b16 %v335, %v334
      %vm338 = vcmask 130048
      %v340 = vsel %vm338, %v322, 0
      %342 = vmatprep.subr.bf16.mxu0 0
      %343 = vmatpush1.bf16.msra.mxu0 0
      %344 = vmatprep.subr.bf16.mxu0 0
      %345 = vmatpush1.bf16.msra.mxu0 0
      %346 = vmatprep.subr.bf16.mxu0 0
      %347 = vmatpush1.bf16.msra.mxu0 0
      %348 = vmatprep.subr.bf16.mxu0 0
      %349 = vmatpush1.bf16.msra.mxu0 0
      %350 = vmatprep.subr.bf16.mxu0 0
      %351 = vmatpush1.bf16.msra.mxu0 0
      %352 = vmatprep.subr.bf16.mxu0 0
      %353 = vmatpush1.bf16.msra.mxu0 0
      %354 = vmatprep.subr.bf16.mxu0 0
      %355 = vmatpush1.bf16.msra.mxu0 0
      %356 = vmatprep.subr.bf16.mxu0 0
      %357 = vmatpush1.bf16.msra.mxu0 %v336
      %358 = vmatprep.subr.bf16.mxu0 0
      %359 = vmatpush2.bf16.msra.mxu0 0
      %360 = vmatprep.subr.bf16.mxu0 0
      %361 = vmatpush2.bf16.msra.mxu0 0
      %362 = vmatprep.subr.bf16.mxu0 0
      %363 = vmatpush2.bf16.msra.mxu0 0
      %364 = vmatprep.subr.bf16.mxu0 0
      %365 = vmatpush2.bf16.msra.mxu0 0
      %366 = vmatprep.subr.bf16.mxu0 0
      %367 = vmatpush2.bf16.msra.mxu0 0
      %368 = vmatprep.subr.bf16.mxu0 0
      %369 = vmatpush2.bf16.msra.mxu0 0
      %370 = vmatprep.subr.bf16.mxu0 0
      %371 = vmatpush2.bf16.msra.mxu0 0
      %372 = vmatprep.subr.bf16.mxu0 0
      %373 = vmatpush2.bf16.msra.mxu0 0
      %374 = vmatprep.mubr.bf16.mxu0 0
      %375 = vmatmul.mubr.bf16.gmra.mxu0 %v340
      %v376 = vpop.f32.mrf.mxu0
      %v377 = vadd.f32 %v330, %v376
      %v378 = vpop.f32.mrf.mxu0
      %v379 = vpop.f32.mrf.mxu0
      %v380 = vpop.f32.mrf.mxu0
      %381 = vdwg.mxu0
      %vm382 = vcmask 31744
      %v383 = vsel %vm382, %v377, -inf
      %384 = vmax.xlane.f32.xlu0 %v383
      %v385 = vpop.xlane.xlu0 %384
      %v386 = vsub.f32 %v377, %v385
      %v387 = vmul.f32 %v386, 1.442695
      %v388 = vpow.pop %v387
      %v389 = vsel %vm382, %v388, 0.0
      %390 = vadd.xlane.f32.xlu0 %v389
      %v391 = vpop.xlane.xlu0 %390
      %v392 = vlog2.pop %v391
      %v393 = vmul.f32 %v392, 0.6931472
      %v394 = vadd.f32 %v385, %v393
      %395 = vset.pattern.permute.xlu0 9
      %396 = vperm.xlu0 %395, %v194
      %v397 = vpop.permute.xlu0 %396
      %vm398 = vcmp.eq.s32.totalorder %v397, %v197
      %v399 = vsel %vm398, %v377, 0.0
      %v400 = vsel %vm382, %v399, 0.0
      %401 = vadd.xlane.f32.xlu0 %v400
      %v402 = vpop.xlane.xlu0 %401
      %v403 = vsub.f32 %v394, %v402
      %vm404 = vcmp.eq.f32.partialorder %v377, %v385
      %v405 = vsel %vm404, %v197, 4
      %v406 = vsel %vm382, %v405, 2147483647
      %v407 = vand.u32 %v406, 65535
      %v408 = vshra.s32 %v406, 16
      %v409 = vcvt.s32.f32 %v407
      %v410 = vcvt.s32.f32 %v408
      %411 = vmin.xlane.f32.xlu0 %v410
      %v412 = vpop.xlane.xlu0 %411
      %vm413 = vcmp.eq.f32.partialorder %v410, %v412
      %v414 = vsel %vm413, %v409, inf
      %415 = vmin.xlane.f32.xlu0 %v414
      %v416 = vpop.xlane.xlu0 %415
      %v417 = vcvt.f32.s32 %v416
      %v418 = vcvt.f32.s32 %v412
      %v419 = vshll.u32 %v418, 16
      %v420 = vadd.s32 %v419, %v417
      %vm421 = vcmp.eq.s32.totalorder %v420, %v194
      %v422 = vsel %vm421, 1, 0
      %v423 = vcvt.s32.f32 %v422
      %vm424 = vcmp.eq.s32.totalorder %v197, 0
      %426 = vset.pattern.permute.xlu0 9
      %427 = vperm.xlu0 %426, %v423
      %v428 = vpop.permute.xlu0 %427
      %v430 = vsel %vm424, %v403, %v428
      %vm431 = vcmask 15360
      %432 = vst.msk [vmem:[%s192] sm:$0xff] %vm431, %v430
      %p433 = scmp.lt.s32.totalorder %s15, 1
      %s434 = scalar_select %p433, %s15, 1
      %s435 = smul.addr %s434, 8
      %s436 = scalar_lea.vmem %s4, %s435
      // Predicated region
      $region37: #{tpu_custom_call.1} parent=35 // pred_check
        %p437 = pneg %p122
      $region38: #{tpu_custom_call.1} parent=35 // pred_check_branch
        %439 = sbr.rel (%p437) target = $region40
      $region39: #{tpu_custom_call.1} parent=35 // pred_region
        _
      $region40: #{tpu_custom_call.1} parent=35 // pred_fallthru
        _
    $region36: #{tpu_custom_call.1} parent=5 // pred_fallthru
      _
    %p440 = scmp.le.s32.totalorder 2, %s10
    // Predicated region
    $region41: #{tpu_custom_call.1} parent=5 // pred_check
      %p441 = pneg %p440
    $region42: #{tpu_custom_call.1} parent=5 // pred_check_branch
      %443 = sbr.rel (%p441) target = $region44
    $region43: #{tpu_custom_call.1} parent=5 // pred_region
      %s444 = ssub.s32 %s10, 2
      // Predicated region
      $region45: #{tpu_custom_call.1} parent=43 // pred_check
        %p445 = pneg %p128
      $region46: #{tpu_custom_call.1} parent=43 // pred_check_branch
        %447 = sbr.rel (%p445) target = $region48
      $region47: #{tpu_custom_call.1} parent=43 // pred_region
        %p448 = scmp.lt.s32.totalorder %s16, 1
        %s449 = scalar_select %p448, %s16, 1
        %s450 = smul.addr %s449, 8
        %s451 = scalar_lea.vmem %s4, %s450
      $region48: #{tpu_custom_call.1} parent=43 // pred_fallthru
        _
    $region44: #{tpu_custom_call.1} parent=5 // pred_fallthru
      _
  $region6: #{tpu_custom_call.1} parent=0 // loop_footer
    %s14 = sadd.s32 1, %s10
  $region7: #{tpu_custom_call.1} parent=0 // loop_footer_branch
    %9 = sbr.rel target = $region3
  $region8: #{tpu_custom_call.1} parent=0 // loop_exit
    _

</llo_original>
